<compile_context>
chip_gen: v6e
topology: v6e:2x2x1
jax: 0.10.0
libtpu: 0.0.40
codegen_flags: <defaults>
</compile_context>

<pallas_src>
import jax
import jax.numpy as jnp
from jax.experimental import pallas as pl
from jax.experimental.pallas import tpu as pltpu


# ----------------------------------------------------------------------------
# Kernel body
# ----------------------------------------------------------------------------
def _make_kernel(with_mask, H, TH, tiles_per_core):
    """Build the kernel.

    tiles_per_core: None  -> grid is (B, n_tiles), program_id(0) is the batch.
                    int   -> grid is (2, tiles_per_core) over H halves (B == 1);
                             program_id(0) is the half index.
    """

    def kernel(*refs):
        if with_mask:
            (rgb_ref, depth_ref, mask_ref,
             out_dx_ref, out_dy_ref, carry_d_ref, carry_g_ref) = refs
        else:
            (rgb_ref, depth_ref,
             out_dx_ref, out_dy_ref, carry_d_ref, carry_g_ref) = refs
            mask_ref = None

        t = pl.program_id(1)                       # tile index local to this core/batch
        if tiles_per_core is None:
            g = t                                  # global H-tile index in the image
        else:
            g = pl.program_id(0) * tiles_per_core + t

        @pl.when(t == 0)
        def _init():
            out_dx_ref[...] = jnp.zeros_like(out_dx_ref)
            out_dy_ref[...] = jnp.zeros_like(out_dy_ref)

        depth = depth_ref[0, 0].astype(jnp.float32)          # (TH, W)
        rgb = rgb_ref[0].astype(jnp.float32)                 # (C, TH, W)
        c = rgb.shape[0]
        gray = jnp.sum(rgb, axis=0) * (1.0 / c)              # channel mean, 1/C folded once

        th, w = depth.shape
        if mask_ref is not None:
            mask_f = mask_ref[0, 0].astype(jnp.float32)      # cast AFTER the DMA

        # Backward differences: position p holds x[p] - x[p-1]. The wrap at
        # p == 0 is discarded by the edge masks below, and the mask applies
        # un-rolled (PyTorch masks diff[i] with mask[i+1], i.e. mask at p).
        d_dx = depth - pltpu.roll(depth, shift=1, axis=1)
        g_dx = gray - pltpu.roll(gray, shift=1, axis=1)
        d_dy = depth - pltpu.roll(depth, shift=1, axis=0)
        g_dy = gray - pltpu.roll(gray, shift=1, axis=0)
        if mask_ref is not None:
            d_dx = d_dx * mask_f
            d_dy = d_dy * mask_f

        # NOTE: discarded wrap / OOB-tail lanes may hit inf/nan inside exp()
        # before the select below; jnp.where discards them (no fp traps on TPU).
        w_dx = jnp.abs(d_dx) * jnp.exp(-g_dx)
        w_dy = jnp.abs(d_dy) * jnp.exp(-g_dy)

        # Edge masks: cheap (1, W) / (TH, 1) iotas broadcast in the select.
        col_pos = jax.lax.broadcasted_iota(jnp.int32, (1, w), 1) > 0     # col >= 1
        row_idx = jax.lax.broadcasted_iota(jnp.int32, (th, 1), 0)
        row_pos = row_idx > 0                                            # row >= 1
        if H % TH == 0:                      # exact tiling: no tail handling
            dx_ok = col_pos
            dy_ok = row_pos
        else:                                # ceil-div tiling: mask OOB tail rows
            valid = jnp.minimum(th, H - g * th)
            row_ok = row_idx < valid
            dx_ok = jnp.logical_and(col_pos, row_ok)
            dy_ok = jnp.logical_and(row_pos, row_ok)

        w_dx = jnp.where(dx_ok, w_dx, 0.0)
        w_dy = jnp.where(dy_ok, w_dy, 0.0)

        # VPU-only partial reduction: fold row-blocks onto the 8 sublanes
        # (same-lane adds); the cross-lane reduce is done once on the host.
        if th % 8 == 0:
            out_dx_ref[...] += jnp.sum(w_dx.reshape(th // 8, 8, w), axis=0)[None]
            out_dy_ref[...] += jnp.sum(w_dy.reshape(th // 8, 8, w), axis=0)[None]
        else:
            # TODO(synk): tile heights that aren't multiples of 8 (only H < 8
            # or a user-forced tile_h) fall back to one cross-sublane reduce.
            out_dx_ref[:, 0:1, :] += jnp.sum(w_dx, axis=0, keepdims=True)[None]
            out_dy_ref[:, 0:1, :] += jnp.sum(w_dy, axis=0, keepdims=True)[None]

        # dy term across the H-tile boundary: this tile's first row minus the
        # previous tile's last row (carried in VMEM -> no halo DMA). Pure VPU,
        # no reduction (added lane-wise to sublane 0 of the output block).
        @pl.when(t > 0)
        def _boundary():
            bd = depth[0:1, :] - carry_d_ref[...]
            bg = gray[0:1, :] - carry_g_ref[...]
            if mask_ref is not None:
                bd = bd * mask_f[0:1, :]
            out_dy_ref[:, 0:1, :] += (jnp.abs(bd) * jnp.exp(-bg))[None]

        carry_d_ref[...] = depth[th - 1:th, :]
        carry_g_ref[...] = gray[th - 1:th, :]

    return kernel


# ----------------------------------------------------------------------------
# Generation-aware tiling / VMEM sizing
# ----------------------------------------------------------------------------
def _vmem_capacity_bytes():
    try:
        return int(pltpu.get_tpu_info().vmem_capacity_bytes)
    except Exception:
        return 64 << 20          # conservative default (v7x per-TensorCore VMEM)


def _vmem_target_bytes():
    cap = _vmem_capacity_bytes()
    if cap >= (96 << 20):
        return 96 << 20          # v5e / v6e: 128 MiB physical -> use most of it
    return max(24 << 20, cap - (24 << 20))   # v7x: 64 MiB -> ~40 MiB target


def _choose_tile_h(H, W, in_row_bytes, target):
    """Largest usable tile height given double-buffered inputs + f32 temps."""
    # ~48 B/pixel of live f32 intermediates (depth/gray/diffs/exp/selects).
    per_row = 2 * in_row_bytes + 48 * W
    fixed = 4 << 20              # output blocks, carries, headroom
    max_rows = max(8, int((target - fixed) // max(per_row, 1)) // 8 * 8)
    if H <= max_rows and (H % 8 == 0 or H < 8):
        return int(H)
    best = None                  # prefer an exact multiple-of-8 divisor of H
    for th in range(8, int(min(H, max_rows)) + 1, 8):
        if H % th == 0:
            best = th
    if best is not None:
        return best
    # no divisor fits: ceil-div tiling, tail rows masked in-kernel
    return int(min(max_rows, ((H + 7) // 8) * 8))


# ----------------------------------------------------------------------------
# Wrapper
# ----------------------------------------------------------------------------
def smooth_depth_loss(rgb, depth, mask=None, *, tile_h=None):
    """rgb: [B, 3, H, W], depth: [B, 1, H, W], mask: [B, 1, H, W] or None.

    bf16 rgb/depth and int8/bool/bf16 masks are the recommended call-site
    convention (the kernel is HBM-bound; compute is f32 in-kernel regardless).
    """
    B, C, H, W = rgb.shape
    assert depth.shape == (B, 1, H, W), depth.shape

    with_mask = mask is not None
    if with_mask:
        # TODO(synk): the PyTorch docstring claims mask is [B, H, W, 1] but the
        # module's slicing only broadcasts correctly for a [B, 1, H, W] mask;
        # we implement the module's actual math (mask assumed >= 0).
        assert mask.shape == (B, 1, H, W), mask.shape
        if mask.dtype == jnp.bool_:
            mask = mask.astype(jnp.int8)   # 1 B/px over the wire; f32 in-kernel
        # float / int masks pass through unchanged (never upcast to f32 here).

    rgb_isz = jnp.dtype(rgb.dtype).itemsize
    depth_isz = jnp.dtype(depth.dtype).itemsize
    mask_isz = jnp.dtype(mask.dtype).itemsize if with_mask else 0
    in_row_bytes = W * (C * rgb_isz + depth_isz + mask_isz)

    vmem_target = _vmem_target_bytes()
    if tile_h is not None:
        TH = int(tile_h)
        assert TH % 8 == 0 or TH == H, "tile_h must be a multiple of 8 (or == H)"
    else:
        TH = _choose_tile_h(H, W, in_row_bytes, vmem_target)
    n_t = pl.cdiv(H, TH)

    # B == 1: split the H-tiles into two halves on a parallel grid axis so both
    # v7x TensorCores are used; the seam row between halves is added on host.
    split = (B == 1 and n_t >= 2 and n_t % 2 == 0)

    if split:
        n_half = n_t // 2
        grid = (2, n_half)
        img_map = lambda h, t: (0, 0, h * n_half + t, 0)
        out_map = lambda h, t: (h, 0, 0)
        out_lead = 2
        tiles_per_core = n_half
    else:
        grid = (B, n_t)
        img_map = lambda b, t: (b, 0, t, 0)
        out_map = lambda b, t: (b, 0, 0)
        out_lead = B
        tiles_per_core = None

    in_specs = [
        pl.BlockSpec((1, C, TH, W), img_map),
        pl.BlockSpec((1, 1, TH, W), img_map),
    ]
    inputs = [rgb, depth]
    if with_mask:
        in_specs.append(pl.BlockSpec((1, 1, TH, W), img_map))
        inputs.append(mask)

    # VMEM footprint: double-buffered input slabs + f32 temporaries + headroom.
    footprint = 2 * TH * in_row_bytes + 48 * TH * W + (4 << 20)
    vmem_limit = int(min(vmem_target, max(32 << 20, footprint + (8 << 20))))

    out_dx, out_dy = pl.pallas_call(
        _make_kernel(with_mask, H, TH, tiles_per_core),
        out_shape=(
            jax.ShapeDtypeStruct((out_lead, 8, W), jnp.float32),
            jax.ShapeDtypeStruct((out_lead, 8, W), jnp.float32),
        ),
        grid_spec=pltpu.PrefetchScalarGridSpec(
            num_scalar_prefetch=0,
            grid=grid,
            in_specs=in_specs,
            out_specs=[
                pl.BlockSpec((1, 8, W), out_map),
                pl.BlockSpec((1, 8, W), out_map),
            ],
            scratch_shapes=[
                pltpu.VMEM((1, W), jnp.float32),   # prev tile's last depth row
                pltpu.VMEM((1, W), jnp.float32),   # prev tile's last gray row
            ],
        ),
        compiler_params=pltpu.CompilerParams(
            dimension_semantics=("parallel", "arbitrary"),
            vmem_limit_bytes=vmem_limit,
        ),
    )(*inputs)

    # Host-side: single cross-lane reduce over the lane-dense partial blocks.
    sum_dx = jnp.sum(out_dx)
    sum_dy = jnp.sum(out_dy)

    if split:
        # Seam row between the two H halves (one row pair), computed on host.
        seam = (n_t // 2) * TH - 1
        d0 = depth[:, 0, seam, :].astype(jnp.float32)
        d1 = depth[:, 0, seam + 1, :].astype(jnp.float32)
        g0 = jnp.mean(rgb[:, :, seam, :].astype(jnp.float32), axis=1)
        g1 = jnp.mean(rgb[:, :, seam + 1, :].astype(jnp.float32), axis=1)
        dd = d1 - d0
        if with_mask:
            dd = dd * mask[:, 0, seam + 1, :].astype(jnp.float32)
        sum_dy = sum_dy + jnp.sum(jnp.abs(dd) * jnp.exp(-(g1 - g0)))

    # Same denominators as torch.mean (masked-out pixels still counted).
    n_dx = B * H * (W - 1)
    n_dy = B * (H - 1) * W
    return sum_dx / n_dx + sum_dy / n_dy


# ----------------------------------------------------------------------------
# Pure-JAX reference (mirror of the PyTorch module)
# ----------------------------------------------------------------------------
def _reference(rgb, depth, mask=None):
    rgb = rgb.astype(jnp.float32)
    depth = depth.astype(jnp.float32)
    depth_dx = jnp.diff(depth, axis=-1)
    depth_dy = jnp.diff(depth, axis=-2)
    if mask is not None:
        mask = mask.astype(jnp.float32)
        depth_dx = depth_dx * mask[:, :, :, 1:]
        depth_dy = depth_dy * mask[:, :, 1:, :]
    rgb_dx = jnp.mean(jnp.diff(rgb, axis=-1), axis=-3, keepdims=True)
    rgb_dy = jnp.mean(jnp.diff(rgb, axis=-2), axis=-3, keepdims=True)
    depth_dx = depth_dx * jnp.exp(-rgb_dx)
    depth_dy = depth_dy * jnp.exp(-rgb_dy)
    return jnp.abs(depth_dx).mean() + jnp.abs(depth_dy).mean()


if __name__ == "__main__":
    key = jax.random.PRNGKey(0)
    k1, k2, k3 = jax.random.split(key, 3)

    # 1) masked (bool mask -> int8 over the wire), H tiled into 2 blocks:
    #    exercises the dy boundary-row carry and the 1-byte mask path.
    B, C, H, W = 2, 3, 64, 256
    rgb = jax.random.uniform(k1, (B, C, H, W), dtype=jnp.float32)
    depth = jax.random.uniform(k2, (B, 1, H, W), dtype=jnp.float32) * 5.0
    mask_b = jax.random.uniform(k3, (B, 1, H, W)) > 0.2
    loss = smooth_depth_loss(rgb, depth, mask_b, tile_h=32)
    jax.block_until_ready(loss)
    ref = _reference(rgb, depth, mask_b)
    assert jnp.allclose(loss, ref, rtol=1e-5, atol=1e-5), (loss, ref)

    # 2) mask-free, auto tile (single full-height block, no mask DMA at all).
    loss = smooth_depth_loss(rgb, depth)
    jax.block_until_ready(loss)
    ref = _reference(rgb, depth)
    assert jnp.allclose(loss, ref, rtol=1e-5, atol=1e-5), (loss, ref)

    # 3) H not divisible by the tile -> ceil-div grid with masked tail rows.
    H2, W2 = 40, 128
    rgb2 = jax.random.uniform(k1, (B, C, H2, W2), dtype=jnp.float32)
    depth2 = jax.random.uniform(k2, (B, 1, H2, W2), dtype=jnp.float32) * 3.0
    loss = smooth_depth_loss(rgb2, depth2, tile_h=16)
    jax.block_until_ready(loss)
    ref = _reference(rgb2, depth2)
    assert jnp.allclose(loss, ref, rtol=1e-5, atol=1e-5), (loss, ref)

    # 4) bf16 inputs + bf16 mask, batch=1: the H-tiles are split across two
    #    parallel halves (both v7x TensorCores) with the seam row on the host.
    rgb3 = rgb[:1].astype(jnp.bfloat16)
    depth3 = depth[:1].astype(jnp.bfloat16)
    mask3 = mask_b[:1].astype(jnp.bfloat16)
    loss = smooth_depth_loss(rgb3, depth3, mask3, tile_h=16)
    jax.block_until_ready(loss)
    ref = _reference(rgb3, depth3, mask3)
    assert jnp.allclose(loss, ref, rtol=1e-4, atol=1e-4), (loss, ref)

    print("KERNEL_OK")
</pallas_src>

<mosaic_0001>
module attributes {stable_mosaic.version = 11 : i64} {
  func.func @kernel(%arg0: i32, %arg1: i32, %arg2: memref<1x3x32x256xf32, #tpu.memory_space<vmem>>, %arg3: memref<1x1x32x256xf32, #tpu.memory_space<vmem>>, %arg4: memref<1x1x32x256xi8, #tpu.memory_space<vmem>>, %arg5: memref<1x8x256xf32, #tpu.memory_space<vmem>>, %arg6: memref<1x8x256xf32, #tpu.memory_space<vmem>>, %arg7: memref<1x256xf32, #tpu.memory_space<vmem>>, %arg8: memref<1x256xf32, #tpu.memory_space<vmem>>) attributes {dimension_semantics = [#tpu.dimension_semantics<parallel>, #tpu.dimension_semantics<arbitrary>], iteration_bounds = array<i64: 2, 2>, scalar_prefetch = 0 : i64, scratch_operands = 2 : i64, tpu.core_type = #tpu.core_type<tc>, window_params = [{transform_indices = @transform_0, window_bounds = array<i64: 1, 3, 32, 256>}, {transform_indices = @transform_1, window_bounds = array<i64: 1, 1, 32, 256>}, {transform_indices = @transform_2, window_bounds = array<i64: 1, 1, 32, 256>}, {transform_indices = @transform_3, window_bounds = array<i64: 1, 8, 256>}, {transform_indices = @transform_4, window_bounds = array<i64: 1, 8, 256>}]} {
    %c0_i32 = arith.constant 0 : i32
    %0 = arith.cmpi eq, %arg1, %c0_i32 : i32
    %1 = arith.extui %0 : i1 to i32
    %c0_i32_0 = arith.constant 0 : i32
    %2 = arith.cmpi ne, %1, %c0_i32_0 : i32
    scf.if %2 {
      %cst_42 = arith.constant 0.000000e+00 : f32
      %66 = vector.broadcast %cst_42 : f32 to vector<1x8x256xf32>
      %c0_43 = arith.constant 0 : index
      %c0_44 = arith.constant 0 : index
      %c0_45 = arith.constant 0 : index
      %67 = vector.load %arg5[%c0_43, %c0_44, %c0_45] : memref<1x8x256xf32, #tpu.memory_space<vmem>>, vector<1x8x256xf32>
      tpu.vector_store %arg5[%c0_43, %c0_44, %c0_45], %66 {strides = array<i32>} : memref<1x8x256xf32, #tpu.memory_space<vmem>>, vector<1x8x256xf32>,
      %cst_46 = arith.constant 0.000000e+00 : f32
      %68 = vector.broadcast %cst_46 : f32 to vector<1x8x256xf32>
      %c0_47 = arith.constant 0 : index
      %c0_48 = arith.constant 0 : index
      %c0_49 = arith.constant 0 : index
      %69 = vector.load %arg6[%c0_47, %c0_48, %c0_49] : memref<1x8x256xf32, #tpu.memory_space<vmem>>, vector<1x8x256xf32>
      tpu.vector_store %arg6[%c0_47, %c0_48, %c0_49], %68 {strides = array<i32>} : memref<1x8x256xf32, #tpu.memory_space<vmem>>, vector<1x8x256xf32>,
    } else {
    }
    %c0 = arith.constant 0 : index
    %c0_1 = arith.constant 0 : index
    %c0_2 = arith.constant 0 : index
    %c0_3 = arith.constant 0 : index
    %3 = vector.load %arg3[%c0, %c0_1, %c0_2, %c0_3] : memref<1x1x32x256xf32, #tpu.memory_space<vmem>>, vector<1x1x32x256xf32>
    %4 = vector.shape_cast %3 : vector<1x1x32x256xf32> to vector<32x256xf32>
    %c0_4 = arith.constant 0 : index
    %c0_5 = arith.constant 0 : index
    %c0_6 = arith.constant 0 : index
    %c0_7 = arith.constant 0 : index
    %5 = vector.load %arg2[%c0_4, %c0_5, %c0_6, %c0_7] : memref<1x3x32x256xf32, #tpu.memory_space<vmem>>, vector<1x3x32x256xf32>
    %6 = vector.shape_cast %5 : vector<1x3x32x256xf32> to vector<3x32x256xf32>
    %cst = arith.constant dense<0.000000e+00> : vector<32x256xf32>
    %7 = vector.multi_reduction <add>, %6, %cst [0] : vector<3x32x256xf32> to vector<32x256xf32>
    %cst_8 = arith.constant 0.333333343 : f32
    %8 = vector.broadcast %cst_8 : f32 to vector<32x256xf32>
    %9 = arith.mulf %7, %8 : vector<32x256xf32>
    %c0_9 = arith.constant 0 : index
    %c0_10 = arith.constant 0 : index
    %c0_11 = arith.constant 0 : index
    %c0_12 = arith.constant 0 : index
    %10 = vector.load %arg4[%c0_9, %c0_10, %c0_11, %c0_12] : memref<1x1x32x256xi8, #tpu.memory_space<vmem>>, vector<1x1x32x256xi8>
    %11 = vector.shape_cast %10 : vector<1x1x32x256xi8> to vector<32x256xi8>
    %12 = arith.sitofp %11 : vector<32x256xi8> to vector<32x256xf32>
    %c1_i32 = arith.constant 1 : i32
    %13 = tpu.dynamic_rotate %4 by %c1_i32 dim 1 : vector<32x256xf32>, i32 -> vector<32x256xf32>
    %14 = arith.subf %4, %13 : vector<32x256xf32>
    %c1_i32_13 = arith.constant 1 : i32
    %15 = tpu.dynamic_rotate %9 by %c1_i32_13 dim 1 : vector<32x256xf32>, i32 -> vector<32x256xf32>
    %16 = arith.subf %9, %15 : vector<32x256xf32>
    %c1_i32_14 = arith.constant 1 : i32
    %17 = tpu.dynamic_rotate %4 by %c1_i32_14 dim 0 : vector<32x256xf32>, i32 -> vector<32x256xf32>
    %18 = arith.subf %4, %17 : vector<32x256xf32>
    %c1_i32_15 = arith.constant 1 : i32
    %19 = tpu.dynamic_rotate %9 by %c1_i32_15 dim 0 : vector<32x256xf32>, i32 -> vector<32x256xf32>
    %20 = arith.subf %9, %19 : vector<32x256xf32>
    %21 = arith.mulf %14, %12 : vector<32x256xf32>
    %22 = arith.mulf %18, %12 : vector<32x256xf32>
    %23 = math.absf %21 : vector<32x256xf32>
    %cst_16 = arith.constant 0.000000e+00 : f32
    %24 = vector.broadcast %cst_16 : f32 to vector<32x256xf32>
    %25 = arith.subf %24, %16 : vector<32x256xf32>
    %26 = math.exp %25 : vector<32x256xf32>
    %27 = arith.mulf %23, %26 : vector<32x256xf32>
    %28 = math.absf %22 : vector<32x256xf32>
    %cst_17 = arith.constant 0.000000e+00 : f32
    %29 = vector.broadcast %cst_17 : f32 to vector<32x256xf32>
    %30 = arith.subf %29, %20 : vector<32x256xf32>
    %31 = math.exp %30 : vector<32x256xf32>
    %32 = arith.mulf %28, %31 : vector<32x256xf32>
    %33 = tpu.iota {dimensions = array<i32: 1>} : vector<1x256xi32>
    %c0_i32_18 = arith.constant 0 : i32
    %34 = vector.broadcast %c0_i32_18 : i32 to vector<1x256xi32>
    %35 = arith.cmpi sgt, %33, %34 : vector<1x256xi32>
    %36 = tpu.iota {dimensions = array<i32: 0>} : vector<32x1xi32>
    %c0_i32_19 = arith.constant 0 : i32
    %37 = vector.broadcast %c0_i32_19 : i32 to vector<32x1xi32>
    %38 = arith.cmpi sgt, %36, %37 : vector<32x1xi32>
    %cst_20 = arith.constant 0.000000e+00 : f32
    %39 = vector.shape_cast %35 : vector<1x256xi1> to vector<1x256xi1>
    %40 = vector.broadcast %39 : vector<1x256xi1> to vector<32x256xi1>
    %41 = vector.broadcast %cst_20 : f32 to vector<32x256xf32>
    %42 = arith.select %40, %27, %41 : vector<32x256xi1>, vector<32x256xf32>
    %cst_21 = arith.constant 0.000000e+00 : f32
    %43 = vector.shape_cast %38 : vector<32x1xi1> to vector<32x1xi1>
    %44 = vector.broadcast %43 : vector<32x1xi1> to vector<32x256xi1>
    %45 = vector.broadcast %cst_21 : f32 to vector<32x256xf32>
    %46 = arith.select %44, %32, %45 : vector<32x256xi1>, vector<32x256xf32>
    %c0_22 = arith.constant 0 : index
    %c0_23 = arith.constant 0 : index
    %c0_24 = arith.constant 0 : index
    %47 = vector.load %arg5[%c0_22, %c0_23, %c0_24] : memref<1x8x256xf32, #tpu.memory_space<vmem>>, vector<1x8x256xf32>
    %48 = vector.shape_cast %42 : vector<32x256xf32> to vector<4x8x256xf32>
    %cst_25 = arith.constant dense<0.000000e+00> : vector<8x256xf32>
    %49 = vector.multi_reduction <add>, %48, %cst_25 [0] : vector<4x8x256xf32> to vector<8x256xf32>
    %50 = vector.shape_cast %49 : vector<8x256xf32> to vector<1x8x256xf32>
    %51 = arith.addf %47, %50 : vector<1x8x256xf32>
    %c0_26 = arith.constant 0 : index
    %c0_27 = arith.constant 0 : index
    %c0_28 = arith.constant 0 : index
    %52 = vector.load %arg5[%c0_26, %c0_27, %c0_28] : memref<1x8x256xf32, #tpu.memory_space<vmem>>, vector<1x8x256xf32>
    tpu.vector_store %arg5[%c0_26, %c0_27, %c0_28], %51 {strides = array<i32>} : memref<1x8x256xf32, #tpu.memory_space<vmem>>, vector<1x8x256xf32>,
    %c0_29 = arith.constant 0 : index
    %c0_30 = arith.constant 0 : index
    %c0_31 = arith.constant 0 : index
    %53 = vector.load %arg6[%c0_29, %c0_30, %c0_31] : memref<1x8x256xf32, #tpu.memory_space<vmem>>, vector<1x8x256xf32>
    %54 = vector.shape_cast %46 : vector<32x256xf32> to vector<4x8x256xf32>
    %cst_32 = arith.constant dense<0.000000e+00> : vector<8x256xf32>
    %55 = vector.multi_reduction <add>, %54, %cst_32 [0] : vector<4x8x256xf32> to vector<8x256xf32>
    %56 = vector.shape_cast %55 : vector<8x256xf32> to vector<1x8x256xf32>
    %57 = arith.addf %53, %56 : vector<1x8x256xf32>
    %c0_33 = arith.constant 0 : index
    %c0_34 = arith.constant 0 : index
    %c0_35 = arith.constant 0 : index
    %58 = vector.load %arg6[%c0_33, %c0_34, %c0_35] : memref<1x8x256xf32, #tpu.memory_space<vmem>>, vector<1x8x256xf32>
    tpu.vector_store %arg6[%c0_33, %c0_34, %c0_35], %57 {strides = array<i32>} : memref<1x8x256xf32, #tpu.memory_space<vmem>>, vector<1x8x256xf32>,
    %c0_i32_36 = arith.constant 0 : i32
    %59 = arith.cmpi sgt, %arg1, %c0_i32_36 : i32
    %60 = arith.extui %59 : i1 to i32
    %c0_i32_37 = arith.constant 0 : i32
    %61 = arith.cmpi ne, %60, %c0_i32_37 : i32
    scf.if %61 {
      %66 = vector.extract_strided_slice %4 {offsets = [0, 0], sizes = [1, 256], strides = [1, 1]} : vector<32x256xf32> to vector<1x256xf32>
      %c0_42 = arith.constant 0 : index
      %c0_43 = arith.constant 0 : index
      %67 = vector.load %arg7[%c0_42, %c0_43] : memref<1x256xf32, #tpu.memory_space<vmem>>, vector<1x256xf32>
      %68 = arith.subf %66, %67 : vector<1x256xf32>
      %69 = vector.extract_strided_slice %9 {offsets = [0, 0], sizes = [1, 256], strides = [1, 1]} : vector<32x256xf32> to vector<1x256xf32>
      %c0_44 = arith.constant 0 : index
      %c0_45 = arith.constant 0 : index
      %70 = vector.load %arg8[%c0_44, %c0_45] : memref<1x256xf32, #tpu.memory_space<vmem>>, vector<1x256xf32>
      %71 = arith.subf %69, %70 : vector<1x256xf32>
      %72 = vector.extract_strided_slice %12 {offsets = [0, 0], sizes = [1, 256], strides = [1, 1]} : vector<32x256xf32> to vector<1x256xf32>
      %73 = arith.mulf %68, %72 : vector<1x256xf32>
      %c0_46 = arith.constant 0 : index
      %c0_47 = arith.constant 0 : index
      %c0_48 = arith.constant 0 : index
      %74 = vector.load %arg6[%c0_46, %c0_47, %c0_48] : memref<1x8x256xf32, #tpu.memory_space<vmem>>, vector<1x1x256xf32>
      %75 = math.absf %73 : vector<1x256xf32>
      %cst_49 = arith.constant 0.000000e+00 : f32
      %76 = vector.broadcast %cst_49 : f32 to vector<1x256xf32>
      %77 = arith.subf %76, %71 : vector<1x256xf32>
      %78 = math.exp %77 : vector<1x256xf32>
      %79 = arith.mulf %75, %78 : vector<1x256xf32>
      %80 = vector.shape_cast %79 : vector<1x256xf32> to vector<1x1x256xf32>
      %81 = arith.addf %74, %80 : vector<1x1x256xf32>
      %c0_50 = arith.constant 0 : index
      %c0_51 = arith.constant 0 : index
      %c0_52 = arith.constant 0 : index
      %82 = vector.load %arg6[%c0_50, %c0_51, %c0_52] : memref<1x8x256xf32, #tpu.memory_space<vmem>>, vector<1x1x256xf32>
      tpu.vector_store %arg6[%c0_50, %c0_51, %c0_52], %81 {strides = array<i32>} : memref<1x8x256xf32, #tpu.memory_space<vmem>>, vector<1x1x256xf32>,
    } else {
    }
    %62 = vector.extract_strided_slice %4 {offsets = [31, 0], sizes = [1, 256], strides = [1, 1]} : vector<32x256xf32> to vector<1x256xf32>
    %c0_38 = arith.constant 0 : index
    %c0_39 = arith.constant 0 : index
    %63 = vector.load %arg7[%c0_38, %c0_39] : memref<1x256xf32, #tpu.memory_space<vmem>>, vector<1x256xf32>
    tpu.vector_store %arg7[%c0_38, %c0_39], %62 {strides = array<i32>} : memref<1x256xf32, #tpu.memory_space<vmem>>, vector<1x256xf32>,
    %64 = vector.extract_strided_slice %9 {offsets = [31, 0], sizes = [1, 256], strides = [1, 1]} : vector<32x256xf32> to vector<1x256xf32>
    %c0_40 = arith.constant 0 : index
    %c0_41 = arith.constant 0 : index
    %65 = vector.load %arg8[%c0_40, %c0_41] : memref<1x256xf32, #tpu.memory_space<vmem>>, vector<1x256xf32>
    tpu.vector_store %arg8[%c0_40, %c0_41], %64 {strides = array<i32>} : memref<1x256xf32, #tpu.memory_space<vmem>>, vector<1x256xf32>,
    return
  }
  func.func @transform_0(%arg0: i32, %arg1: i32) -> (i32, i32, i32, i32) {
    %c0_i32 = arith.constant 0 : i32
    %c0_i32_0 = arith.constant 0 : i32
    %c0_i32_1 = arith.constant 0 : i32
    return %arg0, %c0_i32, %arg1, %c0_i32_0 : i32, i32, i32, i32
  }
  func.func @transform_1(%arg0: i32, %arg1: i32) -> (i32, i32, i32, i32) {
    %c0_i32 = arith.constant 0 : i32
    %c0_i32_0 = arith.constant 0 : i32
    %c0_i32_1 = arith.constant 0 : i32
    return %arg0, %c0_i32, %arg1, %c0_i32_0 : i32, i32, i32, i32
  }
  func.func @transform_2(%arg0: i32, %arg1: i32) -> (i32, i32, i32, i32) {
    %c0_i32 = arith.constant 0 : i32
    %c0_i32_0 = arith.constant 0 : i32
    %c0_i32_1 = arith.constant 0 : i32
    return %arg0, %c0_i32, %arg1, %c0_i32_0 : i32, i32, i32, i32
  }
  func.func @transform_3(%arg0: i32, %arg1: i32) -> (i32, i32, i32) {
    %c0_i32 = arith.constant 0 : i32
    %c0_i32_0 = arith.constant 0 : i32
    %c0_i32_1 = arith.constant 0 : i32
    return %arg0, %c0_i32, %c0_i32_0 : i32, i32, i32
  }
  func.func @transform_4(%arg0: i32, %arg1: i32) -> (i32, i32, i32) {
    %c0_i32 = arith.constant 0 : i32
    %c0_i32_0 = arith.constant 0 : i32
    %c0_i32_1 = arith.constant 0 : i32
    return %arg0, %c0_i32, %c0_i32_0 : i32, i32, i32
  }
}

</mosaic_0001>

<llo_original>
// kernel: tpu_custom_call.1
$region0: #{tpu_custom_call.1}
  #allocation0 [shape = 'u32[]', space=smem, size = 0x4, offset = 0x4, fixed_abs, tag = 'smem constant byte address 0x4 - core index']
  #allocation1 [shape = 'u32[144,128]{1,0:T(1,128)}', space=vmem, size = 0x12000, scoped, tag = 'internal scratch']
  #allocation2 [shape = 'f32[1,256]{1,0:T(1,128)}', space=vmem, size = 0x400, scoped, tag = 'scratch operand']
  #allocation3 [shape = 'f32[1,256]{1,0:T(1,128)}', space=vmem, size = 0x400, scoped, tag = 'scratch operand']
  #allocation13 [shape = 's32[]', space=sflag, size = 0x4, offset = 0, fixed_abs, tag = 'sflag constant byte address 0x0 - dummy sync flag']
  %s0 = inlined_call_operand.hbm [shape: f32[2,3,64,256], index: 0, kind: input, shape index: {}]
  %s1 = inlined_call_operand.hbm [shape: f32[2,1,64,256], index: 1, kind: input, shape index: {}]
  %s2 = inlined_call_operand.hbm [shape: s8[2,1,64,256], index: 2, kind: input, shape index: {}]
  %s3 = inlined_call_operand.hbm [shape: f32[2,8,256], index: 3, kind: output, shape index: {0}]
  %s4 = inlined_call_operand.hbm [shape: f32[2,8,256], index: 4, kind: output, shape index: {1}]
  %5 = xla_tuple %s3, %s4
  %s6 = sld [smem:[#allocation0]]
  $region73: #{tpu_custom_call.1} parent=0
    _
  %s8 = ssub.s32 1, %s6
  %s9 = scalar_select 0, %s8, %s6
  $region1: #{tpu_custom_call.1} parent=0
    #allocation4 [shape = 'u8[196608]{0}', space=vmem, size = 0x30000, scoped, tag = 'input window, operand 0']
    #allocation5 [shape = 's32[2]{0}', space=sflag, size = 0x8, scoped, tag = 'scoped memory for tpu_custom_call.1']
    #allocation6 [shape = 's32[2]{0}', space=sflag, size = 0x8, scoped, tag = 'scoped memory for tpu_custom_call.1']
    #allocation7 [shape = 'u8[65536]{0}', space=vmem, size = 0x10000, scoped, tag = 'input window, operand 1']
    #allocation8 [shape = 's32[2]{0}', space=sflag, size = 0x8, scoped, tag = 'scoped memory for tpu_custom_call.1']
    #allocation9 [shape = 'u8[16384]{0}', space=vmem, size = 0x4000, scoped, tag = 'input window, operand 2']
    #allocation10 [shape = 'u8[16384]{0}', space=vmem, size = 0x4000, scoped, tag = 'output window, operand 0']
    #allocation11 [shape = 'u8[16384]{0}', space=vmem, size = 0x4000, scoped, tag = 'output window, operand 1']
    #allocation12 [shape = 's32[2]{0}', space=sflag, size = 0x8, scoped, tag = 'scoped memory for tpu_custom_call.1']
    %10 = vsyncpa [#allocation5], 0
    %s11 = scalar_lea.sflag [#allocation5], 1
    %12 = vsyncpa %s11, 0
    %13 = vsyncpa [#allocation8], 0
    %s14 = scalar_lea.sflag [#allocation8], 1
    %15 = vsyncpa %s14, 0
    %16 = vsyncpa [#allocation6], 0
    %s17 = scalar_lea.sflag [#allocation6], 1
    %18 = vsyncpa %s17, 0
    %19 = vsyncpa [#allocation12], 0
    %s20 = scalar_lea.sflag [#allocation12], 1
    %21 = vsyncpa %s20, 0
    loop: start=0, step=1, limit=6
    $region2: #{tpu_custom_call.1} parent=1 // loop_pre_header
      _
    $region3: #{tpu_custom_call.1} parent=1 // loop_header
      %s23 = sphi 0, %s27
      %p24 = scmp.ge.s32.totalorder %s23, 6
      %s30 = sphi 0, %s42
      %s31 = sphi 0, %s38
      %s32 = sphi 0, %s30
      %s33 = sphi 0, %s31
      %s34 = sphi 0, %s32
      %s35 = sphi 0, %s33
      %s47 = sphi 0, %s49
      %s50 = sphi 0, %s47
      %s51 = sphi 0, %s50
      %s67 = sphi 0, %s51
      %s75 = sphi 0, %s77
      %s78 = sphi 0, %s75
      %s79 = sphi 0, %s78
      %s95 = sphi 0, %s79
      %s103 = sphi 0, %s105
      %s106 = sphi 0, %s103
      %s107 = sphi 0, %s106
      %s123 = sphi 0, %s107
      %s129 = sphi 0, %s131
      %s132 = sphi 0, %s129
      %s133 = sphi 0, %s132
      %s149 = sphi 0, %s133
      %s155 = sphi 0, %s157
      %s158 = sphi 0, %s155
      %s159 = sphi 0, %s158
      %s175 = sphi 0, %s159
    $region4: #{tpu_custom_call.1} parent=1 // loop_header_branch
      %26 = sbr.rel (%p24) target = $region8
    $region5: #{tpu_custom_call.1} parent=1 // loop_body
      %s28 = ssub.s32 %s23, 1
      %s29 = ssub.s32 %s23, 2
      %s36 = sadd.s32 1, %s31
      %p37 = scmp.ge.s32.totalorder %s36, 2
      %s38 = scalar_select %p37, 0, %s36
      %s39 = sadd.s32 1, %s30
      %s40 = scalar_select %p37, %s39, %s30
      %p41 = scmp.ge.s32.totalorder %s40, 2
      %s42 = scalar_select %p41, 0, %s40
      %s43 = ssub.s32 %s30, %s42
      %s44 = ssub.s32 %s31, %s38
      %s45 = sor.u32 %s43, %s44
      %p46 = scmp.eq.s32.totalorder %s45, 0
      %s48 = sadd.s32 %s47, 1
      %s49 = scalar_select %p46, %s47, %s48
      %p52 = pneg %p46
      %p53 = scmp.eq.s32.totalorder %s23, 3
      %p54 = por %p52, %p53
      %p55 = scmp.ne.s32.totalorder %s47, %s50
      %p56 = scmp.eq.s32.totalorder %s23, 0
      %p57 = por %p55, %p56
      %p58 = scmp.ne.s32.totalorder %s47, %s50
      %p59 = scmp.eq.s32.totalorder %s28, 3
      %p60 = por %p58, %p59
      %p61 = scmp.ne.s32.totalorder %s50, %s51
      %p62 = scmp.eq.s32.totalorder %s28, 0
      %p63 = por %p61, %p62
      %p64 = scmp.ne.s32.totalorder %s50, %s51
      %p65 = scmp.eq.s32.totalorder %s29, 3
      %p66 = por %p64, %p65
      %p68 = scmp.ne.s32.totalorder %s51, %s67
      %p69 = scmp.eq.s32.totalorder %s29, 0
      %p70 = por %p68, %p69
      %s71 = ssub.s32 %s30, %s42
      %s72 = ssub.s32 %s31, %s38
      %s73 = sor.u32 %s71, %s72
      %p74 = scmp.eq.s32.totalorder %s73, 0
      %s76 = sadd.s32 %s75, 1
      %s77 = scalar_select %p74, %s75, %s76
      %p80 = pneg %p74
      %p81 = scmp.eq.s32.totalorder %s23, 3
      %p82 = por %p80, %p81
      %p83 = scmp.ne.s32.totalorder %s75, %s78
      %p84 = scmp.eq.s32.totalorder %s23, 0
      %p85 = por %p83, %p84
      %p86 = scmp.ne.s32.totalorder %s75, %s78
      %p87 = scmp.eq.s32.totalorder %s28, 3
      %p88 = por %p86, %p87
      %p89 = scmp.ne.s32.totalorder %s78, %s79
      %p90 = scmp.eq.s32.totalorder %s28, 0
      %p91 = por %p89, %p90
      %p92 = scmp.ne.s32.totalorder %s78, %s79
      %p93 = scmp.eq.s32.totalorder %s29, 3
      %p94 = por %p92, %p93
      %p96 = scmp.ne.s32.totalorder %s79, %s95
      %p97 = scmp.eq.s32.totalorder %s29, 0
      %p98 = por %p96, %p97
      %s99 = ssub.s32 %s30, %s42
      %s100 = ssub.s32 %s31, %s38
      %s101 = sor.u32 %s99, %s100
      %p102 = scmp.eq.s32.totalorder %s101, 0
      %s104 = sadd.s32 %s103, 1
      %s105 = scalar_select %p102, %s103, %s104
      %p108 = pneg %p102
      %p109 = scmp.eq.s32.totalorder %s23, 3
      %p110 = por %p108, %p109
      %p111 = scmp.ne.s32.totalorder %s103, %s106
      %p112 = scmp.eq.s32.totalorder %s23, 0
      %p113 = por %p111, %p112
      %p114 = scmp.ne.s32.totalorder %s103, %s106
      %p115 = scmp.eq.s32.totalorder %s28, 3
      %p116 = por %p114, %p115
      %p117 = scmp.ne.s32.totalorder %s106, %s107
      %p118 = scmp.eq.s32.totalorder %s28, 0
      %p119 = por %p117, %p118
      %p120 = scmp.ne.s32.totalorder %s106, %s107
      %p121 = scmp.eq.s32.totalorder %s29, 3
      %p122 = por %p120, %p121
      %p124 = scmp.ne.s32.totalorder %s107, %s123
      %p125 = scmp.eq.s32.totalorder %s29, 0
      %p126 = por %p124, %p125
      %s127 = ssub.s32 %s30, %s42
      %p128 = scmp.eq.s32.totalorder %s127, 0
      %s130 = sadd.s32 %s129, 1
      %s131 = scalar_select %p128, %s129, %s130
      %p134 = pneg %p128
      %p135 = scmp.eq.s32.totalorder %s23, 3
      %p136 = por %p134, %p135
      %p137 = scmp.ne.s32.totalorder %s129, %s132
      %p138 = scmp.eq.s32.totalorder %s23, 0
      %p139 = por %p137, %p138
      %p140 = scmp.ne.s32.totalorder %s129, %s132
      %p141 = scmp.eq.s32.totalorder %s28, 3
      %p142 = por %p140, %p141
      %p143 = scmp.ne.s32.totalorder %s132, %s133
      %p144 = scmp.eq.s32.totalorder %s28, 0
      %p145 = por %p143, %p144
      %p146 = scmp.ne.s32.totalorder %s132, %s133
      %p147 = scmp.eq.s32.totalorder %s29, 3
      %p148 = por %p146, %p147
      %p150 = scmp.ne.s32.totalorder %s133, %s149
      %p151 = scmp.eq.s32.totalorder %s29, 0
      %p152 = por %p150, %p151
      %s153 = ssub.s32 %s30, %s42
      %p154 = scmp.eq.s32.totalorder %s153, 0
      %s156 = sadd.s32 %s155, 1
      %s157 = scalar_select %p154, %s155, %s156
      %p160 = pneg %p154
      %p161 = scmp.eq.s32.totalorder %s23, 3
      %p162 = por %p160, %p161
      %p163 = scmp.ne.s32.totalorder %s155, %s158
      %p164 = scmp.eq.s32.totalorder %s23, 0
      %p165 = por %p163, %p164
      %p166 = scmp.ne.s32.totalorder %s155, %s158
      %p167 = scmp.eq.s32.totalorder %s28, 3
      %p168 = por %p166, %p167
      %p169 = scmp.ne.s32.totalorder %s158, %s159
      %p170 = scmp.eq.s32.totalorder %s28, 0
      %p171 = por %p169, %p170
      %p172 = scmp.ne.s32.totalorder %s158, %s159
      %p173 = scmp.eq.s32.totalorder %s29, 3
      %p174 = por %p172, %p173
      %p176 = scmp.ne.s32.totalorder %s159, %s175
      %p177 = scmp.eq.s32.totalorder %s29, 0
      %p178 = por %p176, %p177
      %p179 = scmp.le.s32.totalorder 1, %s23
      %p180 = scmp.lt.s32.totalorder %s23, 5
      %p181 = pnand %p179, %p180
      %p182 = pneg %p181
      // Predicated region
      $region9: #{tpu_custom_call.1} parent=5 // pred_check
        _
      $region10: #{tpu_custom_call.1} parent=5 // pred_check_branch
        %184 = sbr.rel (%p181) target = $region12
      $region11: #{tpu_custom_call.1} parent=5 // pred_region
        %s185 = ssub.s32 %s23, 1
      $region12: #{tpu_custom_call.1} parent=5 // pred_fallthru
        _
      %p186 = scmp.lt.s32.totalorder %s23, 4
      // Predicated region
      $region13: #{tpu_custom_call.1} parent=5 // pred_check
        %p187 = pneg %p186
      $region14: #{tpu_custom_call.1} parent=5 // pred_check_branch
        %189 = sbr.rel (%p187) target = $region16
      $region15: #{tpu_custom_call.1} parent=5 // pred_region
        // Predicated region
        $region17: #{tpu_custom_call.1} parent=15 // pred_check
          %p190 = pneg %p57
        $region18: #{tpu_custom_call.1} parent=15 // pred_check_branch
          %192 = sbr.rel (%p190) target = $region20
        $region19: #{tpu_custom_call.1} parent=15 // pred_region
          #allocation14 [shape = 'u32[6]{0}', space=smem, size = 0x18, scoped, tag = 'DMA stride descriptor']
          %s193 = sand.u32 %s47, 1
          %s194 = scalar_lea.sflag [#allocation5], %s193
          %s195 = sand.u32 %s47, 1
          %s196 = smul.addr %s195, 192
          %s197 = scalar_lea.vmem [#allocation4], %s196
          %s198 = smul.u32 4, %s31
          %s200 = ssub.s32 3072, 3072
          %201 = vsyncadd %s194, %s200
          %s202 = smul.addr %s198, 2
          %s203 = smul.addr %s30, 48
          %s204 = sadd.s32 %s202, %s203
          %s205 = smul.addr %s204, 128
          %s206 = scalar_lea.hbm %s0, %s205
          %s208 = sshll.u32 1, 14
          %s209 = sxor.u32 4294967295, %s208
          %s211 = sld [smem:[#allocation0]]
          %s212 = sadd.s32 2, %s211
          %s214 = sshll.u32 7, 26
          %s215 = sxor.u32 4294967295, %s214
          %s216 = sand.u32 0, %s215
          %s217 = sshll.u32 %s212, 26
          %s218 = sor.u32 %s216, %s217
          %s219 = sshll.u32 %s197, 4
          %s220 = int_to_ptr.vmem [resolvable:$true] %s219
          %226 = sst [smem:[#allocation14]] 2048
          %s227 = scalar_lea.smem [#allocation14], 1
          %228 = sst [smem:[%s227]] 1024
          %s229 = scalar_lea.smem [#allocation14], 2
          %230 = sst [smem:[%s229]] 4
          %s231 = scalar_lea.smem [#allocation14], 3
          %232 = sst [smem:[%s231]] 256
          %s233 = scalar_lea.smem [#allocation14], 4
          %234 = sst [smem:[%s233]] 256
          %s235 = scalar_lea.smem [#allocation14], 5
          %236 = sst [smem:[%s235]] 16
          %238 = dma.general %s206, 3072, %s220, %s194, 131072, [#allocation14], %s218, 0
        $region20: #{tpu_custom_call.1} parent=15 // pred_fallthru
          _
        // Predicated region
        $region21: #{tpu_custom_call.1} parent=15 // pred_check
          %p239 = pneg %p85
        $region22: #{tpu_custom_call.1} parent=15 // pred_check_branch
          %241 = sbr.rel (%p239) target = $region24
        $region23: #{tpu_custom_call.1} parent=15 // pred_region
          %s242 = sand.u32 %s23, 1
          %s243 = scalar_lea.sflag [#allocation8], %s242
          %s244 = sand.u32 %s75, 1
          %s245 = smul.addr %s244, 64
          %s246 = scalar_lea.vmem [#allocation7], %s245
          %s247 = smul.u32 4, %s31
          %s249 = ssub.s32 1024, 1024
          %250 = vsyncadd %s243, %s249
          %s251 = smul.addr %s247, 2
          %s252 = smul.addr %s30, 16
          %s253 = sadd.s32 %s251, %s252
          %s254 = smul.addr %s253, 128
          %s255 = scalar_lea.hbm %s1, %s254
          %s256 = sshll.u32 %s246, 4
          %s257 = int_to_ptr.vmem [resolvable:$true] %s256
          %262 = dma.hbm_to_vmem [thread:$0]  %s255, 1024, %s257, %s243, 256, 256, 16
        $region24: #{tpu_custom_call.1} parent=15 // pred_fallthru
          _
        // Predicated region
        $region25: #{tpu_custom_call.1} parent=15 // pred_check
          %p263 = pneg %p113
        $region26: #{tpu_custom_call.1} parent=15 // pred_check_branch
          %265 = sbr.rel (%p263) target = $region28
        $region27: #{tpu_custom_call.1} parent=15 // pred_region
          %s266 = sand.u32 %s23, 1
          %s267 = scalar_lea.sflag [#allocation8], %s266
          %s268 = sand.u32 %s103, 1
          %s269 = smul.addr %s268, 16
          %s270 = scalar_lea.vmem [#allocation9], %s269
          %s272 = ssub.s32 256, 256
          %273 = vsyncadd %s267, %s272
          %s274 = smul.addr %s31, 2
          %s275 = smul.addr %s30, 4
          %s276 = sadd.s32 %s274, %s275
          %s277 = smul.addr %s276, 128
          %s278 = scalar_lea.hbm %s2, %s277
          %s280 = sshll.u32 %s270, 4
          %s281 = int_to_ptr.vmem [resolvable:$true] %s280
          %283 = dma.hbm_to_vmem [thread:$0]  %s278, 256, %s281, %s267
        $region28: #{tpu_custom_call.1} parent=15 // pred_fallthru
          _
      $region16: #{tpu_custom_call.1} parent=5 // pred_fallthru
        _
      %p284 = scmp.le.s32.totalorder 1, %s23
      %p285 = scmp.lt.s32.totalorder %s23, 5
      %p286 = pnand %p284, %p285
      %p287 = pneg %p286
      // Predicated region
      $region29: #{tpu_custom_call.1} parent=5 // pred_check
        _
      $region30: #{tpu_custom_call.1} parent=5 // pred_check_branch
        %289 = sbr.rel (%p286) target = $region32
      $region31: #{tpu_custom_call.1} parent=5 // pred_region
        %s290 = ssub.s32 %s23, 1
        %s291 = sand.u32 %s50, 1
        %s292 = scalar_lea.sflag [#allocation5], %s291
        %s293 = sand.u32 %s50, 1
        %s294 = smul.addr %s293, 192
        %s295 = scalar_lea.vmem [#allocation4], %s294
        // Predicated region
        $region33: #{tpu_custom_call.1} parent=31 // pred_check
          %p296 = pneg %p63
        $region34: #{tpu_custom_call.1} parent=31 // pred_check_branch
          %298 = sbr.rel (%p296) target = $region36
        $region35: #{tpu_custom_call.1} parent=31 // pred_region
          %299 = dma.done %s292, 3072
        $region36: #{tpu_custom_call.1} parent=31 // pred_fallthru
          _
        %s300 = sand.u32 %s28, 1
        %s301 = scalar_lea.sflag [#allocation8], %s300
        %s302 = sand.u32 %s78, 1
        %s303 = smul.addr %s302, 64
        %s304 = scalar_lea.vmem [#allocation7], %s303
        // Predicated region
        $region37: #{tpu_custom_call.1} parent=31 // pred_check
          %p305 = pneg %p91
        $region38: #{tpu_custom_call.1} parent=31 // pred_check_branch
          %307 = sbr.rel (%p305) target = $region40
        $region39: #{tpu_custom_call.1} parent=31 // pred_region
          %308 = dma.done %s301, 1024
        $region40: #{tpu_custom_call.1} parent=31 // pred_fallthru
          _
        %s309 = sand.u32 %s28, 1
        %s310 = scalar_lea.sflag [#allocation8], %s309
        %s311 = sand.u32 %s106, 1
        %s312 = smul.addr %s311, 16
        %s313 = scalar_lea.vmem [#allocation9], %s312
        // Predicated region
        $region41: #{tpu_custom_call.1} parent=31 // pred_check
          %p314 = pneg %p119
        $region42: #{tpu_custom_call.1} parent=31 // pred_check_branch
          %316 = sbr.rel (%p314) target = $region44
        $region43: #{tpu_custom_call.1} parent=31 // pred_region
          %317 = dma.done %s310, 256
        $region44: #{tpu_custom_call.1} parent=31 // pred_fallthru
          _
        %s318 = sand.u32 %s50, 1
        %s319 = scalar_lea.sflag [#allocation5], %s318
        %s320 = sand.u32 %s50, 1
        %s321 = smul.addr %s320, 192
        %s322 = scalar_lea.vmem [#allocation4], %s321
        %p323 = pneg %p63
        %p324 = pneg %p60
        %s325 = sand.u32 %s28, 1
        %s326 = scalar_lea.sflag [#allocation8], %s325
        %s327 = sand.u32 %s78, 1
        %s328 = smul.addr %s327, 64
        %s329 = scalar_lea.vmem [#allocation7], %s328
        %p330 = pneg %p91
        %p331 = pneg %p88
        %s332 = sand.u32 %s28, 1
        %s333 = scalar_lea.sflag [#allocation8], %s332
        %s334 = sand.u32 %s106, 1
        %s335 = smul.addr %s334, 16
        %s336 = scalar_lea.vmem [#allocation9], %s335
        %p337 = pneg %p119
        %p338 = pneg %p116
        %p339 = pneg %p145
        %p340 = pneg %p142
        %s341 = sand.u32 %s132, 1
        %s342 = scalar_lea.sflag [#allocation6], %s341
        %s343 = sand.u32 %s132, 1
        %s344 = smul.addr %s343, 16
        %s345 = scalar_lea.vmem [#allocation10], %s344
        %p346 = pneg %p171
        %p347 = pneg %p168
        %s348 = sand.u32 %s158, 1
        %s349 = scalar_lea.sflag [#allocation12], %s348
        %s350 = sand.u32 %s158, 1
        %s351 = smul.addr %s350, 16
        %s352 = scalar_lea.vmem [#allocation11], %s351
        %s353 = smul.u32 4, %s33
        %s354 = smul.u32 4, %s33
        %p355 = scmp.eq.s32.totalorder %s33, 0
        // Predicated region
        $region45: #{tpu_custom_call.1} parent=31 // pred_check
          %p356 = pneg %p355
        $region46: #{tpu_custom_call.1} parent=31 // pred_check_branch
          %358 = sbr.rel (%p356) target = $region48
        $region47: #{tpu_custom_call.1} parent=31 // pred_region
          %359 = vst [vmem:[%s345] sm:$0xff] 0.0
          %360 = vst [vmem:[%s345 + $0x8] sm:$0xff] 0.0
          %361 = vst [vmem:[%s352] sm:$0xff] 0.0
          %362 = vst [vmem:[%s352 + $0x8] sm:$0xff] 0.0
        $region48: #{tpu_custom_call.1} parent=31 // pred_fallthru
          _
        %v363 = vld [vmem:[%s304] sm:$0xff]
        %v364 = vld [vmem:[%s304 + $0x8] sm:$0xff]
        %v365 = vld [vmem:[%s304 + $0x10] sm:$0xff]
        %v366 = vld [vmem:[%s304 + $0x18] sm:$0xff]
        %v367 = vld [vmem:[%s304 + $0x20] sm:$0xff]
        %v368 = vld [vmem:[%s304 + $0x28] sm:$0xff]
        %v369 = vld [vmem:[%s304 + $0x30] sm:$0xff]
        %v370 = vld [vmem:[%s304 + $0x38] sm:$0xff]
        %v371 = vld [vmem:[%s295] sm:$0xff]
        %v372 = vld [vmem:[%s295 + $0x8] sm:$0xff]
        %v373 = vld [vmem:[%s295 + $0x10] sm:$0xff]
        %v374 = vld [vmem:[%s295 + $0x18] sm:$0xff]
        %v375 = vld [vmem:[%s295 + $0x20] sm:$0xff]
        %v376 = vld [vmem:[%s295 + $0x28] sm:$0xff]
        %v377 = vld [vmem:[%s295 + $0x30] sm:$0xff]
        %v378 = vld [vmem:[%s295 + $0x38] sm:$0xff]
        %v379 = vld [vmem:[%s295 + $0x40] sm:$0xff]
        %v380 = vld [vmem:[%s295 + $0x48] sm:$0xff]
        %v381 = vld [vmem:[%s295 + $0x50] sm:$0xff]
        %v382 = vld [vmem:[%s295 + $0x58] sm:$0xff]
        %v383 = vld [vmem:[%s295 + $0x60] sm:$0xff]
        %v384 = vld [vmem:[%s295 + $0x68] sm:$0xff]
        %v385 = vld [vmem:[%s295 + $0x70] sm:$0xff]
        %v386 = vld [vmem:[%s295 + $0x78] sm:$0xff]
        %v387 = vld [vmem:[%s295 + $0x80] sm:$0xff]
        %v388 = vld [vmem:[%s295 + $0x88] sm:$0xff]
        %v389 = vld [vmem:[%s295 + $0x90] sm:$0xff]
        %v390 = vld [vmem:[%s295 + $0x98] sm:$0xff]
        %v391 = vld [vmem:[%s295 + $0xa0] sm:$0xff]
        %v392 = vld [vmem:[%s295 + $0xa8] sm:$0xff]
        %v393 = vld [vmem:[%s295 + $0xb0] sm:$0xff]
        %v394 = vld [vmem:[%s295 + $0xb8] sm:$0xff]
        %v395 = vadd.f32 %v371, %v379
        %v396 = vadd.f32 %v395, %v387
        %v397 = vadd.f32 %v372, %v380
        %v398 = vadd.f32 %v397, %v388
        %v399 = vadd.f32 %v373, %v381
        %v400 = vadd.f32 %v399, %v389
        %v401 = vadd.f32 %v374, %v382
        %v402 = vadd.f32 %v401, %v390
        %v403 = vadd.f32 %v375, %v383
        %v404 = vadd.f32 %v403, %v391
        %v405 = vadd.f32 %v376, %v384
        %v406 = vadd.f32 %v405, %v392
        %v407 = vadd.f32 %v377, %v385
        %v408 = vadd.f32 %v407, %v393
        %v409 = vadd.f32 %v378, %v386
        %v410 = vadd.f32 %v409, %v394
        %v411 = vmul.f32 %v396, 0.33333334
        %v412 = vmul.f32 %v398, 0.33333334
        %v413 = vmul.f32 %v400, 0.33333334
        %v414 = vmul.f32 %v402, 0.33333334
        %v415 = vmul.f32 %v404, 0.33333334
        %v416 = vmul.f32 %v406, 0.33333334
        %v417 = vmul.f32 %v408, 0.33333334
        %v418 = vmul.f32 %v410, 0.33333334
        %v419 = vld [vmem:[%s313] sm:$0xff]
        %v420 = vld [vmem:[%s313 + $0x8] sm:$0xff]
        %v421 = vunpack.c.0.s8 %v419
        %v422 = vunpack.c.0.s8 %v420
        %v423 = vunpack.c.1.s8 %v419
        %v424 = vunpack.c.1.s8 %v420
        %v425 = vunpack.c.2.s8 %v419
        %v426 = vunpack.c.2.s8 %v420
        %v427 = vunpack.c.3.s8 %v419
        %v428 = vunpack.c.3.s8 %v420
        %v429 = vcvt.s32.f32 %v421
        %v430 = vcvt.s32.f32 %v422
        %v431 = vcvt.s32.f32 %v423
        %v432 = vcvt.s32.f32 %v424
        %v433 = vcvt.s32.f32 %v425
        %v434 = vcvt.s32.f32 %v426
        %v435 = vcvt.s32.f32 %v427
        %v436 = vcvt.s32.f32 %v428
        %437 = vrot.lane.b32.xlu0 %v363, 1
        %v438 = vpop.permute.xlu0 %437
        %439 = vrot.lane.b32.xlu0 %v365, 1
        %v440 = vpop.permute.xlu0 %439
        %441 = vrot.lane.b32.xlu0 %v367, 1
        %v442 = vpop.permute.xlu0 %441
        %443 = vrot.lane.b32.xlu0 %v369, 1
        %v444 = vpop.permute.xlu0 %443
        %445 = vrot.lane.b32.xlu0 %v364, 1
        %v446 = vpop.permute.xlu0 %445
        %447 = vrot.lane.b32.xlu0 %v366, 1
        %v448 = vpop.permute.xlu0 %447
        %449 = vrot.lane.b32.xlu0 %v368, 1
        %v450 = vpop.permute.xlu0 %449
        %451 = vrot.lane.b32.xlu0 %v370, 1
        %v452 = vpop.permute.xlu0 %451
        %v453 = vlaneseq
        %v454 = vand.u32 %v453, 127
        %vm455 = vcmp.lt.s32.totalorder %v454, 1
        %v456 = vsel %vm455, %v438, %v446
        %v457 = vsel %vm455, %v440, %v448
        %v458 = vsel %vm455, %v442, %v450
        %v459 = vsel %vm455, %v444, %v452
        %v460 = vsel %vm455, %v446, %v438
        %v461 = vsel %vm455, %v448, %v440
        %v462 = vsel %vm455, %v450, %v442
        %v463 = vsel %vm455, %v452, %v444
        %v464 = vsub.f32 %v363, %v460
        %v465 = vsub.f32 %v364, %v456
        %v466 = vsub.f32 %v365, %v461
        %v467 = vsub.f32 %v366, %v457
        %v468 = vsub.f32 %v367, %v462
        %v469 = vsub.f32 %v368, %v458
        %v470 = vsub.f32 %v369, %v463
        %v471 = vsub.f32 %v370, %v459
        %472 = vrot.lane.b32.xlu0 %v411, 1
        %v473 = vpop.permute.xlu0 %472
        %474 = vrot.lane.b32.xlu0 %v413, 1
        %v475 = vpop.permute.xlu0 %474
        %476 = vrot.lane.b32.xlu0 %v415, 1
        %v477 = vpop.permute.xlu0 %476
        %478 = vrot.lane.b32.xlu0 %v417, 1
        %v479 = vpop.permute.xlu0 %478
        %480 = vrot.lane.b32.xlu0 %v412, 1
        %v481 = vpop.permute.xlu0 %480
        %482 = vrot.lane.b32.xlu0 %v414, 1
        %v483 = vpop.permute.xlu0 %482
        %484 = vrot.lane.b32.xlu0 %v416, 1
        %v485 = vpop.permute.xlu0 %484
        %486 = vrot.lane.b32.xlu0 %v418, 1
        %v487 = vpop.permute.xlu0 %486
        %v488 = vsel %vm455, %v473, %v481
        %v489 = vsel %vm455, %v475, %v483
        %v490 = vsel %vm455, %v477, %v485
        %v491 = vsel %vm455, %v479, %v487
        %v492 = vsel %vm455, %v481, %v473
        %v493 = vsel %vm455, %v483, %v475
        %v494 = vsel %vm455, %v485, %v477
        %v495 = vsel %vm455, %v487, %v479
        %v496 = vsub.f32 %v411, %v492
        %v497 = vsub.f32 %v412, %v488
        %v498 = vsub.f32 %v413, %v493
        %v499 = vsub.f32 %v414, %v489
        %v500 = vsub.f32 %v415, %v494
        %v501 = vsub.f32 %v416, %v490
        %v502 = vsub.f32 %v417, %v495
        %v503 = vsub.f32 %v418, %v491
        %v504 = vrot.slane %v363, 7
        %v505 = vrot.slane %v364, 7
        %v506 = vrot.slane %v365, 7
        %v507 = vrot.slane %v366, 7
        %v508 = vrot.slane %v367, 7
        %v509 = vrot.slane %v368, 7
        %v510 = vrot.slane %v369, 7
        %v511 = vrot.slane %v370, 7
        %v512 = vlaneseq
        %v513 = vshrl.u32 %v512, 7
        %vm514 = vcmp.lt.s32.totalorder %v513, 1
        %v515 = vsel %vm514, %v508, %v510
        %v516 = vsel %vm514, %v509, %v511
        %v517 = vsel %vm514, %v506, %v508
        %v518 = vsel %vm514, %v507, %v509
        %v519 = vsel %vm514, %v504, %v506
        %v520 = vsel %vm514, %v505, %v507
        %v521 = vsel %vm514, %v510, %v504
        %v522 = vsel %vm514, %v511, %v505
        %v523 = vsub.f32 %v363, %v521
        %v524 = vsub.f32 %v364, %v522
        %v525 = vsub.f32 %v365, %v519
        %v526 = vsub.f32 %v366, %v520
        %v527 = vsub.f32 %v367, %v517
        %v528 = vsub.f32 %v368, %v518
        %v529 = vsub.f32 %v369, %v515
        %v530 = vsub.f32 %v370, %v516
        %v531 = vrot.slane %v411, 7
        %v532 = vrot.slane %v412, 7
        %v533 = vrot.slane %v413, 7
        %v534 = vrot.slane %v414, 7
        %v535 = vrot.slane %v415, 7
        %v536 = vrot.slane %v416, 7
        %v537 = vrot.slane %v417, 7
        %v538 = vrot.slane %v418, 7
        %v539 = vsel %vm514, %v535, %v537
        %v540 = vsel %vm514, %v536, %v538
        %v541 = vsel %vm514, %v533, %v535
        %v542 = vsel %vm514, %v534, %v536
        %v543 = vsel %vm514, %v531, %v533
        %v544 = vsel %vm514, %v532, %v534
        %v545 = vsel %vm514, %v537, %v531
        %v546 = vsel %vm514, %v538, %v532
        %v547 = vsub.f32 %v411, %v545
        %v548 = vsub.f32 %v412, %v546
        %v549 = vsub.f32 %v413, %v543
        %v550 = vsub.f32 %v414, %v544
        %v551 = vsub.f32 %v415, %v541
        %v552 = vsub.f32 %v416, %v542
        %v553 = vsub.f32 %v417, %v539
        %v554 = vsub.f32 %v418, %v540
        %v555 = vmul.f32 %v464, %v429
        %v556 = vmul.f32 %v465, %v430
        %v557 = vmul.f32 %v466, %v431
        %v558 = vmul.f32 %v467, %v432
        %v559 = vmul.f32 %v468, %v433
        %v560 = vmul.f32 %v469, %v434
        %v561 = vmul.f32 %v470, %v435
        %v562 = vmul.f32 %v471, %v436
        %v563 = vmul.f32 %v523, %v429
        %v564 = vmul.f32 %v524, %v430
        %v565 = vmul.f32 %v525, %v431
        %v566 = vmul.f32 %v526, %v432
        %v567 = vmul.f32 %v527, %v433
        %v568 = vmul.f32 %v528, %v434
        %v569 = vmul.f32 %v529, %v435
        %v570 = vmul.f32 %v530, %v436
        %v571 = vand.u32 2147483647, %v555
        %v572 = vand.u32 2147483647, %v556
        %v573 = vand.u32 2147483647, %v557
        %v574 = vand.u32 2147483647, %v558
        %v575 = vand.u32 2147483647, %v559
        %v576 = vand.u32 2147483647, %v560
        %v577 = vand.u32 2147483647, %v561
        %v578 = vand.u32 2147483647, %v562
        %v579 = vsub.f32 0.0, %v496
        %v580 = vsub.f32 0.0, %v497
        %v581 = vsub.f32 0.0, %v498
        %v582 = vsub.f32 0.0, %v499
        %v583 = vsub.f32 0.0, %v500
        %v584 = vsub.f32 0.0, %v501
        %v585 = vsub.f32 0.0, %v502
        %v586 = vsub.f32 0.0, %v503
        %v587 = vmul.f32 %v579, 1.442695
        %v588 = vpow.pop %v587
        %v589 = vmul.f32 %v580, 1.442695
        %v590 = vpow.pop %v589
        %v591 = vmul.f32 %v581, 1.442695
        %v592 = vpow.pop %v591
        %v593 = vmul.f32 %v582, 1.442695
        %v594 = vpow.pop %v593
        %v595 = vmul.f32 %v583, 1.442695
        %v596 = vpow.pop %v595
        %v597 = vmul.f32 %v584, 1.442695
        %v598 = vpow.pop %v597
        %v599 = vmul.f32 %v585, 1.442695
        %v600 = vpow.pop %v599
        %v601 = vmul.f32 %v586, 1.442695
        %v602 = vpow.pop %v601
        %v603 = vmul.f32 %v571, %v588
        %v604 = vmul.f32 %v572, %v590
        %v605 = vmul.f32 %v573, %v592
        %v606 = vmul.f32 %v574, %v594
        %v607 = vmul.f32 %v575, %v596
        %v608 = vmul.f32 %v576, %v598
        %v609 = vmul.f32 %v577, %v600
        %v610 = vmul.f32 %v578, %v602
        %v611 = vand.u32 2147483647, %v563
        %v612 = vand.u32 2147483647, %v564
        %v613 = vand.u32 2147483647, %v565
        %v614 = vand.u32 2147483647, %v566
        %v615 = vand.u32 2147483647, %v567
        %v616 = vand.u32 2147483647, %v568
        %v617 = vand.u32 2147483647, %v569
        %v618 = vand.u32 2147483647, %v570
        %v619 = vsub.f32 0.0, %v547
        %v620 = vsub.f32 0.0, %v548
        %v621 = vsub.f32 0.0, %v549
        %v622 = vsub.f32 0.0, %v550
        %v623 = vsub.f32 0.0, %v551
        %v624 = vsub.f32 0.0, %v552
        %v625 = vsub.f32 0.0, %v553
        %v626 = vsub.f32 0.0, %v554
        %v627 = vmul.f32 %v619, 1.442695
        %v628 = vpow.pop %v627
        %v629 = vmul.f32 %v620, 1.442695
        %v630 = vpow.pop %v629
        %v631 = vmul.f32 %v621, 1.442695
        %v632 = vpow.pop %v631
        %v633 = vmul.f32 %v622, 1.442695
        %v634 = vpow.pop %v633
        %v635 = vmul.f32 %v623, 1.442695
        %v636 = vpow.pop %v635
        %v637 = vmul.f32 %v624, 1.442695
        %v638 = vpow.pop %v637
        %v639 = vmul.f32 %v625, 1.442695
        %v640 = vpow.pop %v639
        %v641 = vmul.f32 %v626, 1.442695
        %v642 = vpow.pop %v641
        %v643 = vmul.f32 %v611, %v628
        %v644 = vmul.f32 %v612, %v630
        %v645 = vmul.f32 %v613, %v632
        %v646 = vmul.f32 %v614, %v634
        %v647 = vmul.f32 %v615, %v636
        %v648 = vmul.f32 %v616, %v638
        %v649 = vmul.f32 %v617, %v640
        %v650 = vmul.f32 %v618, %v642
        %v651 = vadd.s32 %v454, 128
        %vm652 = vcmp.gt.s32.totalorder %v454, 0
        %vm653 = vcmp.gt.s32.totalorder %v651, 0
        %v654 = vadd.s32 %v513, 8
        %v655 = vadd.s32 %v513, 16
        %v656 = vadd.s32 %v513, 24
        %vm657 = vcmp.gt.s32.totalorder %v513, 0
        %vm658 = vcmp.gt.s32.totalorder %v654, 0
        %vm659 = vcmp.gt.s32.totalorder %v655, 0
        %vm660 = vcmp.gt.s32.totalorder %v656, 0
        %v661 = vsel %vm652, 1, 0
        %v662 = vsel %vm653, 1, 0
        %vm663 = vcmp.eq.s32.totalorder %v661, 1
        %vm664 = vcmp.eq.s32.totalorder %v662, 1
        %v665 = vsel %vm663, %v603, 0.0
        %v666 = vsel %vm664, %v604, 0.0
        %v667 = vsel %vm663, %v605, 0.0
        %v668 = vsel %vm664, %v606, 0.0
        %v669 = vsel %vm663, %v607, 0.0
        %v670 = vsel %vm664, %v608, 0.0
        %v671 = vsel %vm663, %v609, 0.0
        %v672 = vsel %vm664, %v610, 0.0
        %v673 = vsel %vm657, 1, 0
        %v674 = vsel %vm658, 1, 0
        %v675 = vsel %vm659, 1, 0
        %v676 = vsel %vm660, 1, 0
        %vm677 = vcmp.eq.s32.totalorder %v673, 1
        %vm678 = vcmp.eq.s32.totalorder %v674, 1
        %vm679 = vcmp.eq.s32.totalorder %v675, 1
        %vm680 = vcmp.eq.s32.totalorder %v676, 1
        %v681 = vsel %vm677, %v643, 0.0
        %v682 = vsel %vm677, %v644, 0.0
        %v683 = vsel %vm678, %v645, 0.0
        %v684 = vsel %vm678, %v646, 0.0
        %v685 = vsel %vm679, %v647, 0.0
        %v686 = vsel %vm679, %v648, 0.0
        %v687 = vsel %vm680, %v649, 0.0
        %v688 = vsel %vm680, %v650, 0.0
        %v689 = vld [vmem:[%s345] sm:$0xff]
        %v690 = vld [vmem:[%s345 + $0x8] sm:$0xff]
        %v691 = vadd.f32 %v665, %v667
        %v692 = vadd.f32 %v691, %v669
        %v693 = vadd.f32 %v692, %v671
        %v694 = vadd.f32 %v666, %v668
        %v695 = vadd.f32 %v694, %v670
        %v696 = vadd.f32 %v695, %v672
        %v697 = vadd.f32 %v689, %v693
        %v698 = vadd.f32 %v690, %v696
        %699 = vst [vmem:[%s345] sm:$0xff] %v697
        %700 = vst [vmem:[%s345 + $0x8] sm:$0xff] %v698
        %v701 = vld [vmem:[%s352] sm:$0xff]
        %v702 = vld [vmem:[%s352 + $0x8] sm:$0xff]
        %v703 = vadd.f32 %v681, %v683
        %v704 = vadd.f32 %v703, %v685
        %v705 = vadd.f32 %v704, %v687
        %v706 = vadd.f32 %v682, %v684
        %v707 = vadd.f32 %v706, %v686
        %v708 = vadd.f32 %v707, %v688
        %v709 = vadd.f32 %v701, %v705
        %v710 = vadd.f32 %v702, %v708
        %711 = vst [vmem:[%s352] sm:$0xff] %v709
        %712 = vst [vmem:[%s352 + $0x8] sm:$0xff] %v710
        %p713 = scmp.gt.s32.totalorder %s33, 0
        // Predicated region
        $region49: #{tpu_custom_call.1} parent=31 // pred_check
          %p714 = pneg %p713
        $region50: #{tpu_custom_call.1} parent=31 // pred_check_branch
          %716 = sbr.rel (%p714) target = $region52
        $region51: #{tpu_custom_call.1} parent=31 // pred_region
          %v717 = vld [vmem:[#allocation2] sm:$0x3]
          %v719 = vlaneseq
          %v720 = vshrl.u32 %v719, 7
          %v721 = vsub.s32 0, %v720
          %v722 = vrot.slane %v717, %v721
          %v723 = vlaneseq
          %v724 = vshrl.u32 %v723, 7
          %v725 = vsub.s32 1, %v724
          %v726 = vrot.slane %v717, %v725
          %v729 = vsub.f32 %v363, %v722
          %v730 = vsub.f32 %v364, %v726
          %v731 = vld [vmem:[#allocation3] sm:$0x3]
          %v733 = vlaneseq
          %v734 = vshrl.u32 %v733, 7
          %v735 = vsub.s32 0, %v734
          %v736 = vrot.slane %v731, %v735
          %v737 = vlaneseq
          %v738 = vshrl.u32 %v737, 7
          %v739 = vsub.s32 1, %v738
          %v740 = vrot.slane %v731, %v739
          %v743 = vsub.f32 %v411, %v736
          %v744 = vsub.f32 %v412, %v740
          %v745 = vmul.f32 %v729, %v429
          %v746 = vmul.f32 %v730, %v430
          %v747 = vld [vmem:[%s352] ss:$8 sm:$0x3]
          %v748 = vand.u32 2147483647, %v745
          %v749 = vand.u32 2147483647, %v746
          %v750 = vsub.f32 0.0, %v743
          %v751 = vsub.f32 0.0, %v744
          %v752 = vmul.f32 %v750, 1.442695
          %v753 = vpow.pop %v752
          %v754 = vmul.f32 %v751, 1.442695
          %v755 = vpow.pop %v754
          %v756 = vmul.f32 %v748, %v753
          %v757 = vmul.f32 %v749, %v755
          %v760 = vcombine.low %v756, %v757
          %v762 = vunpack.c.l.s4 1966171168
          %v763 = vunpack.c.0.s8 %v762
          %v764 = vlaneseq
          %v765 = vshrl.u32 %v764, 7
          %v766 = vsub.s32 %v763, %v765
          %v767 = vrot.slane %v760, %v766
          %v769 = vunpack.c.l.s4 1966171168
          %v770 = vunpack.c.0.s8 %v769
          %v771 = vlaneseq
          %v772 = vshrl.u32 %v771, 7
          %v773 = vsub.s32 %v770, %v772
          %v774 = vrot.slane %v767, %v773
          %v776 = vadd.f32 %v747, %v774
          %v777 = vlaneseq
          %vm778 = vcmp.ge.s32.totalorder %v777, 0
          %vm779 = vcmp.lt.s32.totalorder %v777, 256
          %vm780 = vmand %vm778, %vm779
          %781 = vst.msk [vmem:[%s352] ss:$8 sm:$0x3] %vm780, %v776
          %782 = vst.msk [vmem:[%s352] ss:$8 sm:$0x0] %vm780, %v776
        $region52: #{tpu_custom_call.1} parent=31 // pred_fallthru
          _
        %v785 = vcombine.high %v369, %v370
        %v787 = vunpack.c.l.s4 1966171168
        %v788 = vunpack.c.0.s8 %v787
        %v789 = vlaneseq
        %v790 = vshrl.u32 %v789, 7
        %v791 = vsub.s32 %v788, %v790
        %v792 = vrot.slane %v785, %v791
        %v793 = vcombine.high %v792, %v792
        %v795 = vunpack.c.l.s4 1966171168
        %v796 = vunpack.c.0.s8 %v795
        %v797 = vlaneseq
        %v798 = vshrl.u32 %v797, 7
        %v799 = vsub.s32 %v796, %v798
        %v800 = vrot.slane %v793, %v799
        %v801 = vcombine.high %v800, %v800
        %v803 = vlaneseq
        %vm804 = vcmp.ge.s32.totalorder %v803, 0
        %vm805 = vcmp.lt.s32.totalorder %v803, 256
        %vm806 = vmand %vm804, %vm805
        %807 = vst.msk [vmem:[#allocation2] sm:$0x3] %vm806, %v801
        %v810 = vcombine.high %v417, %v418
        %v812 = vunpack.c.l.s4 1966171168
        %v813 = vunpack.c.0.s8 %v812
        %v814 = vlaneseq
        %v815 = vshrl.u32 %v814, 7
        %v816 = vsub.s32 %v813, %v815
        %v817 = vrot.slane %v810, %v816
        %v818 = vcombine.high %v817, %v817
        %v820 = vunpack.c.l.s4 1966171168
        %v821 = vunpack.c.0.s8 %v820
        %v822 = vlaneseq
        %v823 = vshrl.u32 %v822, 7
        %v824 = vsub.s32 %v821, %v823
        %v825 = vrot.slane %v818, %v824
        %v826 = vcombine.high %v825, %v825
        %828 = vst.msk [vmem:[#allocation3] sm:$0x3] %vm806, %v826
        %s829 = sand.u32 %s132, 1
        %s830 = scalar_lea.sflag [#allocation6], %s829
        %s831 = sand.u32 %s132, 1
        %s832 = smul.addr %s831, 16
        %s833 = scalar_lea.vmem [#allocation10], %s832
        %s834 = sand.u32 %s158, 1
        %s835 = scalar_lea.sflag [#allocation12], %s834
        %s836 = sand.u32 %s158, 1
        %s837 = smul.addr %s836, 16
        %s838 = scalar_lea.vmem [#allocation11], %s837
        // Predicated region
        $region53: #{tpu_custom_call.1} parent=31 // pred_check
          %p839 = pneg %p142
        $region54: #{tpu_custom_call.1} parent=31 // pred_check_branch
          %841 = sbr.rel (%p839) target = $region56
        $region55: #{tpu_custom_call.1} parent=31 // pred_region
          %s843 = ssub.s32 256, 256
          %844 = vsyncadd %s830, %s843
          %s845 = smul.addr %s32, 2
          %s846 = smul.addr %s845, 128
          %s847 = scalar_lea.hbm %s3, %s846
          %s849 = sshll.u32 %s833, 4
          %s850 = int_to_ptr.vmem [resolvable:$true] %s849
          %852 = dma.vmem_to_hbm [thread:$0]  %s850, 256, %s847, %s830
        $region56: #{tpu_custom_call.1} parent=31 // pred_fallthru
          _
        // Predicated region
        $region57: #{tpu_custom_call.1} parent=31 // pred_check
          %p853 = pneg %p168
        $region58: #{tpu_custom_call.1} parent=31 // pred_check_branch
          %855 = sbr.rel (%p853) target = $region60
        $region59: #{tpu_custom_call.1} parent=31 // pred_region
          %s857 = ssub.s32 256, 256
          %858 = vsyncadd %s835, %s857
          %s859 = smul.addr %s32, 2
          %s860 = smul.addr %s859, 128
          %s861 = scalar_lea.hbm %s4, %s860
          %s863 = sshll.u32 %s838, 4
          %s864 = int_to_ptr.vmem [resolvable:$true] %s863
          %866 = dma.vmem_to_hbm [thread:$0]  %s864, 256, %s861, %s835
        $region60: #{tpu_custom_call.1} parent=31 // pred_fallthru
          _
      $region32: #{tpu_custom_call.1} parent=5 // pred_fallthru
        _
      %p867 = scmp.le.s32.totalorder 2, %s23
      // Predicated region
      $region61: #{tpu_custom_call.1} parent=5 // pred_check
        %p868 = pneg %p867
      $region62: #{tpu_custom_call.1} parent=5 // pred_check_branch
        %870 = sbr.rel (%p868) target = $region64
      $region63: #{tpu_custom_call.1} parent=5 // pred_region
        %s871 = ssub.s32 %s23, 2
        // Predicated region
        $region65: #{tpu_custom_call.1} parent=63 // pred_check
          %p872 = pneg %p148
        $region66: #{tpu_custom_call.1} parent=63 // pred_check_branch
          %874 = sbr.rel (%p872) target = $region68
        $region67: #{tpu_custom_call.1} parent=63 // pred_region
          %s875 = sand.u32 %s133, 1
          %s876 = scalar_lea.sflag [#allocation6], %s875
          %s877 = sand.u32 %s133, 1
          %s878 = smul.addr %s877, 16
          %s879 = scalar_lea.vmem [#allocation10], %s878
          %880 = dma.done %s876, 256
        $region68: #{tpu_custom_call.1} parent=63 // pred_fallthru
          _
        // Predicated region
        $region69: #{tpu_custom_call.1} parent=63 // pred_check
          %p881 = pneg %p174
        $region70: #{tpu_custom_call.1} parent=63 // pred_check_branch
          %883 = sbr.rel (%p881) target = $region72
        $region71: #{tpu_custom_call.1} parent=63 // pred_region
          %s884 = sand.u32 %s159, 1
          %s885 = scalar_lea.sflag [#allocation12], %s884
          %s886 = sand.u32 %s159, 1
          %s887 = smul.addr %s886, 16
          %s888 = scalar_lea.vmem [#allocation11], %s887
          %889 = dma.done %s885, 256
        $region72: #{tpu_custom_call.1} parent=63 // pred_fallthru
          _
      $region64: #{tpu_custom_call.1} parent=5 // pred_fallthru
        _
    $region6: #{tpu_custom_call.1} parent=1 // loop_footer
      %s27 = sadd.s32 1, %s23
    $region7: #{tpu_custom_call.1} parent=1 // loop_footer_branch
      %22 = sbr.rel target = $region3
    $region8: #{tpu_custom_call.1} parent=1 // loop_exit
      _
    %890 = vsyncpa [#allocation5], 1
    %s891 = scalar_lea.sflag [#allocation5], 1
    %892 = vsyncpa %s891, 1
    %893 = vsyncpa [#allocation8], 1
    %s894 = scalar_lea.sflag [#allocation8], 1
    %895 = vsyncpa %s894, 1
    %896 = vsyncpa [#allocation6], 1
    %s897 = scalar_lea.sflag [#allocation6], 1
    %898 = vsyncpa %s897, 1
    %899 = vsyncpa [#allocation12], 1
    %s900 = scalar_lea.sflag [#allocation12], 1
    %901 = vsyncpa %s900, 1

</llo_original>
